<compile_context>
chip_gen: v7x
topology: tpu7x:2x2x1
jax: 0.10.0
libtpu: 0.0.40
codegen_flags: <defaults>
</compile_context>

<pallas_src>
import functools

import jax
import jax.numpy as jnp
from jax.experimental import pallas as pl
from jax.experimental.pallas import tpu as pltpu

LANES = 128  # TPU lane width: slab / output lane axis
X_BLOCK_ROWS = 8  # the x row lives in its own 8-row-aligned block at the top


def _round_up(n, m):
    return (n + m - 1) // m * m


def _layout(hidden_dim):
    """Static slab layout. One extra 'bias unit' row folds b2 into layer 2."""
    hid_rows = _round_up(hidden_dim + 1, 8)   # +1 row for the b2 bias unit
    w1_off = X_BLOCK_ROWS                     # W1^T_aug block
    w2_off = w1_off + hid_rows                # W2_aug block (includes b2 row)
    n_rows = w2_off + hid_rows
    return hid_rows, w1_off, w2_off, n_rows


def _hnet_kernel(slab_ref, o_ref, *, w1_off, w2_off, hid_rows):
    # Static, 8-row-aligned views into the packed slab (no relayout copies).
    x_row = slab_ref[0:1, :]                           # (1, 128): [x | 1.0 | 0...]
    w1t_a = slab_ref[w1_off:w1_off + hid_rows, :]      # (H, 128): [W1^T | b1] rows,
                                                       #   row hidden_dim = bias unit
    w2_a = slab_ref[w2_off:w2_off + hid_rows, :]       # (H, 128): W2 rows, row hidden_dim = b2

    # Layer 1 as a VPU GEMV: hidden units on sublanes, XLU lane-reduce.
    #   h[j] = sum_l W1^T_aug[j, l] * x_aug[l]   (b1 folded via the 1.0 lane;
    #   row hidden_dim reduces to exactly 1.0 -> carries b2 through layer 2)
    h = jnp.maximum(jnp.sum(w1t_a * x_row, axis=-1, keepdims=True), 0.0)  # (H, 1)

    # Layer 2 as a VPU GEMV: outputs on lanes, XLU sublane-reduce. b2 folded.
    o_ref[...] = jnp.sum(w2_a * h, axis=0, keepdims=True)                 # (1, 128)


def pack_hypernetwork_params(x, w1, b1, w2, b2):
    """Build the canonical packed parameter slab.  Call ONCE when parameters
    change (this is the parameter storage), not per forward().

    x: (1, input_dim); w1: (input_dim, hidden); b1: (1, hidden);
    w2: (hidden, output); b2: (1, output)."""
    input_dim = x.shape[1]
    hidden_dim = w1.shape[1]
    output_dim = w2.shape[1]
    assert input_dim + 1 <= LANES, "bias-fold lane requires input_dim + 1 <= 128"
    assert output_dim <= LANES, "single lane-block output requires output_dim <= 128"

    hid_rows, w1_off, w2_off, n_rows = _layout(hidden_dim)

    slab = jnp.zeros((n_rows, LANES), jnp.float32)

    # x row, augmented with 1.0 at lane `input_dim` so biases fold into reduces.
    x_aug = (jnp.zeros((LANES,), jnp.float32)
             .at[:input_dim].set(x[0].astype(jnp.float32))
             .at[input_dim].set(1.0))
    slab = slab.at[0].set(x_aug)

    # W1^T augmented with b1 as an extra column; padded row `hidden_dim` carries a
    # forced 1.0 at the bias lane so h[hidden_dim] == ReLU(1.0) == 1.0.
    w1t_aug = jnp.concatenate([w1.T.astype(jnp.float32),
                               b1.T.astype(jnp.float32)], axis=1)  # (hidden, input_dim+1)
    slab = slab.at[w1_off:w1_off + hidden_dim, :input_dim + 1].set(w1t_aug)
    slab = slab.at[w1_off + hidden_dim, input_dim].set(1.0)

    # W2 rows, plus b2 as row `hidden_dim` (picked up by the h[hidden_dim]==1.0 unit).
    slab = slab.at[w2_off:w2_off + hidden_dim, :output_dim].set(w2.astype(jnp.float32))
    slab = slab.at[w2_off + hidden_dim, :output_dim].set(b2[0].astype(jnp.float32))
    return slab


def _forward_padded(slab):
    """Gridless pallas_call on the pre-packed slab -> lane-dense (1, 128) row."""
    n_rows = slab.shape[0]
    hid_rows = (n_rows - X_BLOCK_ROWS) // 2
    w1_off = X_BLOCK_ROWS
    w2_off = w1_off + hid_rows

    kernel = functools.partial(
        _hnet_kernel, w1_off=w1_off, w2_off=w2_off, hid_rows=hid_rows)

    slab_bytes = n_rows * LANES * 4
    cost = pl.CostEstimate(
        flops=4 * hid_rows * LANES,          # two broadcast-mul + reduce GEMVs (padded)
        transcendentals=0,
        bytes_accessed=slab_bytes + LANES * 4)

    return pl.pallas_call(
        kernel,
        out_shape=jax.ShapeDtypeStruct((1, LANES), jnp.float32),
        in_specs=[pl.BlockSpec(memory_space=pltpu.MemorySpace.VMEM)],
        out_specs=pl.BlockSpec(memory_space=pltpu.MemorySpace.VMEM),
        cost_estimate=cost,
    )(slab)


@functools.partial(jax.jit, static_argnames=("output_dim",))
def hypernetwork_forward(slab, *, output_dim):
    """Hot-path forward(): takes the pre-packed slab, returns (output_dim,) float32
    (matching the PyTorch forward()'s .squeeze(0)).  The slice lives inside this
    jit so it fuses into the same executable as the kernel."""
    out = _forward_padded(slab)
    return out[0, :output_dim]


def reference_forward(x, w1, b1, w2, b2):
    h = jnp.maximum(x @ w1 + b1, 0.0)
    return (h @ w2 + b2)[0]


if __name__ == "__main__":
    # Small shapes consistent with the module's constructor.
    input_dim, hidden_dim, output_dim = 8, 32, 16

    key = jax.random.PRNGKey(0)
    k_in, k_w1, k_b1, k_w2, k_b2 = jax.random.split(key, 5)

    # Deterministic synthetic parameters (nn.Linear weights stored pre-transposed
    # so the math is x @ W + b).
    hypernetwork_input = jax.random.normal(k_in, (1, input_dim), dtype=jnp.float32)
    w1 = jax.random.normal(k_w1, (input_dim, hidden_dim), dtype=jnp.float32) * 0.1
    b1 = jax.random.normal(k_b1, (1, hidden_dim), dtype=jnp.float32) * 0.1
    w2 = jax.random.normal(k_w2, (hidden_dim, output_dim), dtype=jnp.float32) * 0.1
    b2 = jax.random.normal(k_b2, (1, output_dim), dtype=jnp.float32) * 0.1

    # One-time packing (canonical parameter storage; redone only when params change).
    slab = jax.block_until_ready(
        pack_hypernetwork_params(hypernetwork_input, w1, b1, w2, b2))

    # Hot-path forward: single gridless pallas_call on the pre-packed slab.
    out = hypernetwork_forward(slab, output_dim=output_dim)
    out = jax.block_until_ready(out)

    ref = reference_forward(hypernetwork_input, w1, b1, w2, b2)
    assert out.shape == (output_dim,), out.shape
    assert jnp.allclose(out, ref, atol=1e-5, rtol=1e-5), "mismatch vs reference"

    print("KERNEL_OK")
</pallas_src>

<mosaic_0001>
module attributes {stable_mosaic.version = 11 : i64} {
  func.func @_hnet_kernel(%arg0: memref<88x128xf32, #tpu.memory_space<vmem>>, %arg1: memref<1x128xf32, #tpu.memory_space<vmem>>) attributes {dimension_semantics = [], scalar_prefetch = 0 : i64, scratch_operands = 0 : i64, tpu.core_type = #tpu.core_type<tc>} {
    %c0 = arith.constant 0 : index
    %c0_0 = arith.constant 0 : index
    %0 = vector.load %arg0[%c0, %c0_0] : memref<88x128xf32, #tpu.memory_space<vmem>>, vector<1x128xf32>
    %c8 = arith.constant 8 : index
    %c0_1 = arith.constant 0 : index
    %1 = vector.load %arg0[%c8, %c0_1] : memref<88x128xf32, #tpu.memory_space<vmem>>, vector<40x128xf32>
    %c48 = arith.constant 48 : index
    %c0_2 = arith.constant 0 : index
    %2 = vector.load %arg0[%c48, %c0_2] : memref<88x128xf32, #tpu.memory_space<vmem>>, vector<40x128xf32>
    %3 = vector.broadcast %0 : vector<1x128xf32> to vector<40x128xf32>
    %4 = arith.mulf %1, %3 : vector<40x128xf32>
    %cst = arith.constant dense<0.000000e+00> : vector<40xf32>
    %5 = vector.multi_reduction <add>, %4, %cst [1] : vector<40x128xf32> to vector<40xf32>
    %6 = vector.shape_cast %5 : vector<40xf32> to vector<40x1xf32>
    %cst_3 = arith.constant 0.000000e+00 : f32
    %7 = vector.broadcast %cst_3 : f32 to vector<40x1xf32>
    %8 = arith.maximumf %6, %7 : vector<40x1xf32>
    %9 = vector.broadcast %8 : vector<40x1xf32> to vector<40x128xf32>
    %10 = arith.mulf %2, %9 : vector<40x128xf32>
    %cst_4 = arith.constant dense<0.000000e+00> : vector<128xf32>
    %11 = vector.multi_reduction <add>, %10, %cst_4 [0] : vector<40x128xf32> to vector<128xf32>
    %12 = vector.shape_cast %11 : vector<128xf32> to vector<1x128xf32>
    %c0_5 = arith.constant 0 : index
    %c0_6 = arith.constant 0 : index
    %13 = vector.load %arg1[%c0_5, %c0_6] : memref<1x128xf32, #tpu.memory_space<vmem>>, vector<1x128xf32>
    tpu.vector_store %arg1[%c0_5, %c0_6], %12 {strides = array<i32>} : memref<1x128xf32, #tpu.memory_space<vmem>>, vector<1x128xf32>,
    return
  }
}

</mosaic_0001>

<llo_original>
// kernel: hypernetwork_forward.1
$region0: #{hypernetwork_forward.1}
  #allocation0 [shape = 'u32[]', space=smem, size = 0x4, offset = 0x4, fixed_abs, tag = 'smem constant byte address 0x4 - core index']
  #allocation1 [shape = 'u32[144,128]{1,0:T(1,128)}', space=vmem, size = 0x12000, scoped, tag = 'internal scratch']
  %s0 = inlined_call_operand.hbm [shape: f32[88,128], index: 0, kind: input, shape index: {}]
  %s1 = inlined_call_operand.vmem [shape: f32[1,128], index: 1, kind: output, shape index: {}]
  %s2 = sld [smem:[#allocation0]]
  $region18: #{hypernetwork_forward.1} parent=0
    _
  %s4 = ssub.s32 1, %s2
  %s5 = scalar_select 0, %s4, %s2
  $region1: #{hypernetwork_forward.1} parent=0
    #allocation2 [shape = 'u8[45056]{0}', space=vmem, size = 0xb000, scoped, tag = 'input window, operand 0, single buffered']
    #allocation3 [shape = 's32[1]{0}', space=sflag, size = 0x4, scoped, tag = 'scoped memory for hypernetwork_forward.1']
    %6 = vsyncpa [#allocation3], 0
    // Predicated region
    $region2: #{hypernetwork_forward.1} parent=1 // pred_check
      _
    $region3: #{hypernetwork_forward.1} parent=1 // pred_check_branch
      %8 = sbr.rel (0) target = $region5
    $region4: #{hypernetwork_forward.1} parent=1 // pred_region
      %s10 = ssub.s32 1408, 1408
      %11 = vsyncadd [#allocation3], %s10
      %s12 = sshll.u32 [#allocation2], 4
      %s13 = int_to_ptr.vmem [resolvable:$true] %s12
      %18 = dma.hbm_to_vmem [thread:$0]  %s0, 1408, %s13, [#allocation3], 128, 128, 8
    $region5: #{hypernetwork_forward.1} parent=1 // pred_fallthru
      _
    // Predicated region
    $region6: #{hypernetwork_forward.1} parent=1 // pred_check
      _
    $region7: #{hypernetwork_forward.1} parent=1 // pred_check_branch
      %20 = sbr.rel (0) target = $region9
    $region8: #{hypernetwork_forward.1} parent=1 // pred_region
      %21 = dma.done [#allocation3], 1408
    $region9: #{hypernetwork_forward.1} parent=1 // pred_fallthru
      _
    %v22 = vld [vmem:[#allocation2] sm:$0x1]
    %v23 = vld [vmem:[#allocation2 + $0x8] sm:$0xff]
    %v24 = vld [vmem:[#allocation2 + $0x10] sm:$0xff]
    %v25 = vld [vmem:[#allocation2 + $0x18] sm:$0xff]
    %v26 = vld [vmem:[#allocation2 + $0x20] sm:$0xff]
    %v27 = vld [vmem:[#allocation2 + $0x28] sm:$0xff]
    %v28 = vld [vmem:[#allocation2 + $0x30] sm:$0xff]
    %v29 = vld [vmem:[#allocation2 + $0x38] sm:$0xff]
    %v30 = vld [vmem:[#allocation2 + $0x40] sm:$0xff]
    %v31 = vld [vmem:[#allocation2 + $0x48] sm:$0xff]
    %v32 = vld [vmem:[#allocation2 + $0x50] sm:$0xff]
    %v33 = vlaneseq
    %v34 = vshrl.u32 %v33, 7
    %v35 = vsub.s32 0, %v34
    %v36 = vrot.slane %v22, %v35
    %v37 = vmul.f32 %v23, %v36
    %v38 = vmul.f32 %v24, %v36
    %v39 = vmul.f32 %v25, %v36
    %v40 = vmul.f32 %v26, %v36
    %v41 = vmul.f32 %v27, %v36
    %42 = vadd.xlane.f32.xlu0 %v37
    %v43 = vpop.xlane.xlu0 %42
    %44 = vadd.xlane.f32.xlu0 %v38
    %v45 = vpop.xlane.xlu0 %44
    %46 = vadd.xlane.f32.xlu0 %v39
    %v47 = vpop.xlane.xlu0 %46
    %48 = vadd.xlane.f32.xlu0 %v40
    %v49 = vpop.xlane.xlu0 %48
    %50 = vadd.xlane.f32.xlu0 %v41
    %v51 = vpop.xlane.xlu0 %50
    %v52 = vmax.f32 %v43, 0.0
    %v53 = vmax.f32 %v45, 0.0
    %v54 = vmax.f32 %v47, 0.0
    %v55 = vmax.f32 %v49, 0.0
    %v56 = vmax.f32 %v51, 0.0
    %v57 = vmul.f32 %v28, %v52
    %v58 = vmul.f32 %v29, %v53
    %v59 = vmul.f32 %v30, %v54
    %v60 = vmul.f32 %v31, %v55
    %v61 = vmul.f32 %v32, %v56
    %v62 = vadd.f32 %v57, %v58
    %v63 = vadd.f32 %v62, %v59
    %v64 = vadd.f32 %v63, %v60
    %v65 = vadd.f32 %v64, %v61
    %v66 = vrot.slane %v65, 4
    %v67 = vadd.f32 %v65, %v66
    %v68 = vrot.slane %v67, 2
    %v69 = vadd.f32 %v67, %v68
    %v70 = vrot.slane %v69, 1
    %v71 = vadd.f32 %v69, %v70
    %72 = vst [vmem:[%s1] sm:$0x1] %v71
    // Predicated region
    $region10: #{hypernetwork_forward.1} parent=1 // pred_check
      _
    $region11: #{hypernetwork_forward.1} parent=1 // pred_check_branch
      %74 = sbr.rel (0) target = $region13
    $region12: #{hypernetwork_forward.1} parent=1 // pred_region
      _
    $region13: #{hypernetwork_forward.1} parent=1 // pred_fallthru
      _
    // Predicated region
    $region14: #{hypernetwork_forward.1} parent=1 // pred_check
      _
    $region15: #{hypernetwork_forward.1} parent=1 // pred_check_branch
      %76 = sbr.rel (0) target = $region17
    $region16: #{hypernetwork_forward.1} parent=1 // pred_region
      _
    $region17: #{hypernetwork_forward.1} parent=1 // pred_fallthru
      _
    %77 = vsyncpa [#allocation3], 1

</llo_original>
